<compile_context>
chip_gen: v5e
topology: v5e:2x2
jax: 0.10.0
libtpu: 0.0.40
codegen_flags: <defaults>
</compile_context>

<pallas_src>
import functools

import jax
import jax.numpy as jnp
from jax.experimental import pallas as pl
from jax.experimental.pallas import tpu as pltpu

IN_FEATURES = 512
OUT_FEATURES = 9

# Batch-tile size: 2048 rows * 512 feats * 4 B = 4 MiB per x buffer.
TARGET_TB = 2048


def _linear_kernel(x_ref, wt_ref, b_ref, o_ref):
    # x_ref : (TB, 512)  VMEM   (streamed along the batch grid axis)
    # wt_ref: (512, 9)   VMEM   (resident: W transposed)
    # b_ref : (1, 9)     VMEM   (resident)
    # o_ref : (TB, 9)    VMEM
    acc = jnp.dot(x_ref[...], wt_ref[...], preferred_element_type=jnp.float32)
    o_ref[...] = (acc + b_ref[...]).astype(o_ref.dtype)


def prepare_params(weight, bias):
    """Hoist layout prep out of the per-call path.

    weight: (9, 512), bias: (9,)  ->  wt: (512, 9), b2: (1, 9)
    """
    return weight.T, bias.reshape(1, OUT_FEATURES)


@functools.partial(jax.jit, static_argnames=())
def classifier_forward(x, wt, b2):
    """x: (B, 512), wt: (512, 9), b2: (1, 9)  ->  (B, 9) f32."""
    batch = x.shape[0]

    if batch <= TARGET_TB:
        # Small batch: a single full-extent block (always a legal block shape).
        tb = batch
    else:
        # Large batch: tile rows (multiple of 8 sublanes); last block is padded.
        tb = TARGET_TB

    grid = (pl.cdiv(batch, tb),)

    return pl.pallas_call(
        _linear_kernel,
        out_shape=jax.ShapeDtypeStruct((batch, OUT_FEATURES), jnp.float32),
        grid_spec=pltpu.PrefetchScalarGridSpec(
            num_scalar_prefetch=0,
            grid=grid,
            in_specs=[
                # x: streamed along the batch grid axis (double-buffered DMA).
                pl.BlockSpec((tb, IN_FEATURES), lambda i: (i, 0)),
                # weight / bias: same block every step -> resident in VMEM.
                pl.BlockSpec((IN_FEATURES, OUT_FEATURES), lambda i: (0, 0)),
                pl.BlockSpec((1, OUT_FEATURES), lambda i: (0, 0)),
            ],
            out_specs=pl.BlockSpec((tb, OUT_FEATURES), lambda i: (i, 0)),
        ),
        compiler_params=pltpu.CompilerParams(
            # Batch rows are independent: shard grid across both TCs on v7x.
            dimension_semantics=("parallel",),
        ),
    )(x, wt, b2)


def init_params(key):
    """Deterministic init matching torch.nn.Linear default (U[-k, k], k=1/sqrt(fan_in))."""
    k_w, k_b = jax.random.split(key)
    bound = 1.0 / (IN_FEATURES ** 0.5)
    weight = jax.random.uniform(
        k_w, (OUT_FEATURES, IN_FEATURES), jnp.float32, -bound, bound)
    bias = jax.random.uniform(
        k_b, (OUT_FEATURES,), jnp.float32, -bound, bound)
    return weight, bias


if __name__ == "__main__":
    key = jax.random.PRNGKey(0)
    k_params, k_x1, k_x2 = jax.random.split(key, 3)

    weight, bias = init_params(k_params)
    wt, b2 = prepare_params(weight, bias)  # done once, outside the call path

    # Small-batch check (single full-extent block path).
    batch = 8
    x = jax.random.normal(k_x1, (batch, IN_FEATURES), jnp.float32)
    out = jax.block_until_ready(classifier_forward(x, wt, b2))
    ref = x @ weight.T + bias
    assert out.shape == (batch, OUT_FEATURES)
    assert jnp.allclose(out, ref, atol=1e-5, rtol=1e-5)

    # Larger-batch check exercising the tiled / pipelined grid path
    # (non-multiple of the tile size to also exercise the padded last block).
    big_batch = 2 * TARGET_TB + 136
    xb = jax.random.normal(k_x2, (big_batch, IN_FEATURES), jnp.float32)
    out_b = jax.block_until_ready(classifier_forward(xb, wt, b2))
    ref_b = xb @ weight.T + bias
    assert out_b.shape == (big_batch, OUT_FEATURES)
    assert jnp.allclose(out_b, ref_b, atol=1e-4, rtol=1e-5)

    print("KERNEL_OK")
</pallas_src>

<mosaic_0001>
module attributes {stable_mosaic.version = 11 : i64} {
  func.func @_linear_kernel(%arg0: i32, %arg1: memref<8x512xf32, #tpu.memory_space<vmem>>, %arg2: memref<512x9xf32, #tpu.memory_space<vmem>>, %arg3: memref<1x9xf32, #tpu.memory_space<vmem>>, %arg4: memref<8x9xf32, #tpu.memory_space<vmem>>) attributes {dimension_semantics = [#tpu.dimension_semantics<parallel>], iteration_bounds = array<i64: 1>, scalar_prefetch = 0 : i64, scratch_operands = 0 : i64, tpu.core_type = #tpu.core_type<tc>, window_params = [{transform_indices = @transform_0, window_bounds = array<i64: 8, 512>}, {pipeline_mode = #tpu.pipeline_mode<synchronous>, transform_indices = @transform_1, window_bounds = array<i64: 512, 9>}, {pipeline_mode = #tpu.pipeline_mode<synchronous>, transform_indices = @transform_2, window_bounds = array<i64: 1, 9>}, {transform_indices = @transform_3, window_bounds = array<i64: 8, 9>}]} {
    %c0 = arith.constant 0 : index
    %c0_0 = arith.constant 0 : index
    %0 = vector.load %arg1[%c0, %c0_0] : memref<8x512xf32, #tpu.memory_space<vmem>>, vector<8x512xf32>
    %c0_1 = arith.constant 0 : index
    %c0_2 = arith.constant 0 : index
    %1 = vector.load %arg2[%c0_1, %c0_2] : memref<512x9xf32, #tpu.memory_space<vmem>>, vector<512x9xf32>
    %cst = arith.constant dense<0.000000e+00> : vector<8x9xf32>
    %2 = tpu.matmul %0, %1, %cst {dimension_numbers = #tpu.dot_dimension_numbers<[1], [0], [0], [1], [0, 0, 1, 1], [], []>} : vector<8x512xf32>, vector<512x9xf32>, vector<8x9xf32> -> vector<8x9xf32>
    %c0_3 = arith.constant 0 : index
    %c0_4 = arith.constant 0 : index
    %3 = vector.load %arg3[%c0_3, %c0_4] : memref<1x9xf32, #tpu.memory_space<vmem>>, vector<1x9xf32>
    %4 = vector.broadcast %3 : vector<1x9xf32> to vector<8x9xf32>
    %5 = arith.addf %2, %4 : vector<8x9xf32>
    %c0_5 = arith.constant 0 : index
    %c0_6 = arith.constant 0 : index
    %6 = vector.load %arg4[%c0_5, %c0_6] : memref<8x9xf32, #tpu.memory_space<vmem>>, vector<8x9xf32>
    tpu.vector_store %arg4[%c0_5, %c0_6], %5 {strides = array<i32>} : memref<8x9xf32, #tpu.memory_space<vmem>>, vector<8x9xf32>,
    return
  }
  func.func @transform_0(%arg0: i32) -> (i32, i32) {
    %c0_i32 = arith.constant 0 : i32
    %c0_i32_0 = arith.constant 0 : i32
    return %arg0, %c0_i32 : i32, i32
  }
  func.func @transform_1(%arg0: i32) -> (i32, i32) {
    %c0_i32 = arith.constant 0 : i32
    %c0_i32_0 = arith.constant 0 : i32
    %c0_i32_1 = arith.constant 0 : i32
    return %c0_i32, %c0_i32_0 : i32, i32
  }
  func.func @transform_2(%arg0: i32) -> (i32, i32) {
    %c0_i32 = arith.constant 0 : i32
    %c0_i32_0 = arith.constant 0 : i32
    %c0_i32_1 = arith.constant 0 : i32
    return %c0_i32, %c0_i32_0 : i32, i32
  }
  func.func @transform_3(%arg0: i32) -> (i32, i32) {
    %c0_i32 = arith.constant 0 : i32
    %c0_i32_0 = arith.constant 0 : i32
    return %arg0, %c0_i32 : i32, i32
  }
}

</mosaic_0001>

<llo_original>
// kernel: classifier_forward.1
$region0: #{classifier_forward.1}
  #allocation0 [shape = 'u32[]', space=smem, size = 0x4, offset = 0x4, fixed_abs, tag = 'smem constant byte address 0x4 - core index']
  #allocation1 [shape = 'u32[72,128]{1,0:T(1,128)}', space=vmem, size = 0x9000, scoped, tag = 'internal scratch']
  %s0 = inlined_call_operand.vmem [shape: f32[8,512], index: 0, kind: input, shape index: {}]
  %s1 = inlined_call_operand.vmem [shape: f32[512,9], index: 1, kind: input, shape index: {}]
  %s2 = inlined_call_operand.vmem [shape: f32[1,9], index: 2, kind: input, shape index: {}]
  %s3 = inlined_call_operand.hbm [shape: f32[8,9], index: 3, kind: output, shape index: {}]
  %s4 = sld [smem:[#allocation0]]
  $region22: #{classifier_forward.1} parent=0
    _
  %s6 = ssub.s32 1, %s4
  %s7 = scalar_select 0, %s6, %s4
  $region1: #{classifier_forward.1} parent=0
    #allocation2 [shape = 'u8[4096]{0}', space=vmem, size = 0x1000, scoped, tag = 'output window, operand 0, single buffered']
    #allocation3 [shape = 's32[1]{0}', space=sflag, size = 0x4, scoped, tag = 'scoped memory for classifier_forward.1']
    %8 = vsyncpa [#allocation3], 0
    // Predicated region
    $region2: #{classifier_forward.1} parent=1 // pred_check
      _
    $region3: #{classifier_forward.1} parent=1 // pred_check_branch
      %10 = sbr.rel (0) target = $region5
    $region4: #{classifier_forward.1} parent=1 // pred_region
      _
    $region5: #{classifier_forward.1} parent=1 // pred_fallthru
      _
    // Predicated region
    $region6: #{classifier_forward.1} parent=1 // pred_check
      _
    $region7: #{classifier_forward.1} parent=1 // pred_check_branch
      %12 = sbr.rel (0) target = $region9
    $region8: #{classifier_forward.1} parent=1 // pred_region
      _
    $region9: #{classifier_forward.1} parent=1 // pred_fallthru
      _
    // Predicated region
    $region10: #{classifier_forward.1} parent=1 // pred_check
      _
    $region11: #{classifier_forward.1} parent=1 // pred_check_branch
      %14 = sbr.rel (0) target = $region13
    $region12: #{classifier_forward.1} parent=1 // pred_region
      _
    $region13: #{classifier_forward.1} parent=1 // pred_fallthru
      _
    %v15 = vld [vmem:[%s0] sm:$0xff]
    %v16 = vld [vmem:[%s0 + $0x8] sm:$0xff]
    %v17 = vld [vmem:[%s0 + $0x10] sm:$0xff]
    %v18 = vld [vmem:[%s0 + $0x18] sm:$0xff]
    %v19 = vld [vmem:[%s1] sm:$0xff]
    %v20 = vld [vmem:[%s1 + $0x8] sm:$0xff]
    %v21 = vld [vmem:[%s1 + $0x10] sm:$0xff]
    %v22 = vld [vmem:[%s1 + $0x18] sm:$0xff]
    %v23 = vld [vmem:[%s1 + $0x20] sm:$0xff]
    %v24 = vld [vmem:[%s1 + $0x28] sm:$0xff]
    %v25 = vld [vmem:[%s1 + $0x30] sm:$0xff]
    %v26 = vld [vmem:[%s1 + $0x38] sm:$0xff]
    %v27 = vld [vmem:[%s1 + $0x40] sm:$0xff]
    %v28 = vld [vmem:[%s1 + $0x48] sm:$0xff]
    %v29 = vld [vmem:[%s1 + $0x50] sm:$0xff]
    %v30 = vld [vmem:[%s1 + $0x58] sm:$0xff]
    %v31 = vld [vmem:[%s1 + $0x60] sm:$0xff]
    %v32 = vld [vmem:[%s1 + $0x68] sm:$0xff]
    %v33 = vld [vmem:[%s1 + $0x70] sm:$0xff]
    %v34 = vld [vmem:[%s1 + $0x78] sm:$0xff]
    %v35 = vld [vmem:[%s1 + $0x80] sm:$0xff]
    %v36 = vld [vmem:[%s1 + $0x88] sm:$0xff]
    %v37 = vld [vmem:[%s1 + $0x90] sm:$0xff]
    %v38 = vld [vmem:[%s1 + $0x98] sm:$0xff]
    %v39 = vld [vmem:[%s1 + $0xa0] sm:$0xff]
    %v40 = vld [vmem:[%s1 + $0xa8] sm:$0xff]
    %v41 = vld [vmem:[%s1 + $0xb0] sm:$0xff]
    %v42 = vld [vmem:[%s1 + $0xb8] sm:$0xff]
    %v43 = vld [vmem:[%s1 + $0xc0] sm:$0xff]
    %v44 = vld [vmem:[%s1 + $0xc8] sm:$0xff]
    %v45 = vld [vmem:[%s1 + $0xd0] sm:$0xff]
    %v46 = vld [vmem:[%s1 + $0xd8] sm:$0xff]
    %v47 = vld [vmem:[%s1 + $0xe0] sm:$0xff]
    %v48 = vld [vmem:[%s1 + $0xe8] sm:$0xff]
    %v49 = vld [vmem:[%s1 + $0xf0] sm:$0xff]
    %v50 = vld [vmem:[%s1 + $0xf8] sm:$0xff]
    %v51 = vld [vmem:[%s1 + $0x100] sm:$0xff]
    %v52 = vld [vmem:[%s1 + $0x108] sm:$0xff]
    %v53 = vld [vmem:[%s1 + $0x110] sm:$0xff]
    %v54 = vld [vmem:[%s1 + $0x118] sm:$0xff]
    %v55 = vld [vmem:[%s1 + $0x120] sm:$0xff]
    %v56 = vld [vmem:[%s1 + $0x128] sm:$0xff]
    %v57 = vld [vmem:[%s1 + $0x130] sm:$0xff]
    %v58 = vld [vmem:[%s1 + $0x138] sm:$0xff]
    %v59 = vld [vmem:[%s1 + $0x140] sm:$0xff]
    %v60 = vld [vmem:[%s1 + $0x148] sm:$0xff]
    %v61 = vld [vmem:[%s1 + $0x150] sm:$0xff]
    %v62 = vld [vmem:[%s1 + $0x158] sm:$0xff]
    %v63 = vld [vmem:[%s1 + $0x160] sm:$0xff]
    %v64 = vld [vmem:[%s1 + $0x168] sm:$0xff]
    %v65 = vld [vmem:[%s1 + $0x170] sm:$0xff]
    %v66 = vld [vmem:[%s1 + $0x178] sm:$0xff]
    %v67 = vld [vmem:[%s1 + $0x180] sm:$0xff]
    %v68 = vld [vmem:[%s1 + $0x188] sm:$0xff]
    %v69 = vld [vmem:[%s1 + $0x190] sm:$0xff]
    %v70 = vld [vmem:[%s1 + $0x198] sm:$0xff]
    %v71 = vld [vmem:[%s1 + $0x1a0] sm:$0xff]
    %v72 = vld [vmem:[%s1 + $0x1a8] sm:$0xff]
    %v73 = vld [vmem:[%s1 + $0x1b0] sm:$0xff]
    %v74 = vld [vmem:[%s1 + $0x1b8] sm:$0xff]
    %v75 = vld [vmem:[%s1 + $0x1c0] sm:$0xff]
    %v76 = vld [vmem:[%s1 + $0x1c8] sm:$0xff]
    %v77 = vld [vmem:[%s1 + $0x1d0] sm:$0xff]
    %v78 = vld [vmem:[%s1 + $0x1d8] sm:$0xff]
    %v79 = vld [vmem:[%s1 + $0x1e0] sm:$0xff]
    %v80 = vld [vmem:[%s1 + $0x1e8] sm:$0xff]
    %v81 = vld [vmem:[%s1 + $0x1f0] sm:$0xff]
    %v82 = vld [vmem:[%s1 + $0x1f8] sm:$0xff]
    %v83 = vld [vmem:[%s2] sm:$0x1]
    %v85 = vperm.slane %v83, 0
    %87 = vmatpush.msra.mxu0 %v34
    %88 = vmatpush.msra.mxu0 %v33
    %89 = vmatpush.msra.mxu0 %v32
    %90 = vmatpush.msra.mxu0 %v31
    %91 = vmatpush.msra.mxu0 %v30
    %92 = vmatpush.msra.mxu0 %v29
    %93 = vmatpush.msra.mxu0 %v28
    %94 = vmatpush.msra.mxu0 %v27
    %95 = vmatpush.msra.mxu0 %v26
    %96 = vmatpush.msra.mxu0 %v25
    %97 = vmatpush.msra.mxu0 %v24
    %98 = vmatpush.msra.mxu0 %v23
    %99 = vmatpush.msra.mxu0 %v22
    %100 = vmatpush.msra.mxu0 %v21
    %101 = vmatpush.msra.mxu0 %v20
    %102 = vmatpush.msra.mxu0 %v19
    %103 = vmatmul.f32.gmra.mxu0 %v15
    %v104 = vpop.f32.mrf.mxu0
    %v105 = vadd.f32 %v85, %v104
    %106 = vdwg.mxu0
    %107 = vmatpush.msra.mxu0 %v50
    %108 = vmatpush.msra.mxu0 %v49
    %109 = vmatpush.msra.mxu0 %v48
    %110 = vmatpush.msra.mxu0 %v47
    %111 = vmatpush.msra.mxu0 %v46
    %112 = vmatpush.msra.mxu0 %v45
    %113 = vmatpush.msra.mxu0 %v44
    %114 = vmatpush.msra.mxu0 %v43
    %115 = vmatpush.msra.mxu0 %v42
    %116 = vmatpush.msra.mxu0 %v41
    %117 = vmatpush.msra.mxu0 %v40
    %118 = vmatpush.msra.mxu0 %v39
    %119 = vmatpush.msra.mxu0 %v38
    %120 = vmatpush.msra.mxu0 %v37
    %121 = vmatpush.msra.mxu0 %v36
    %122 = vmatpush.msra.mxu0 %v35
    %123 = vmatmul.f32.gmra.mxu0 %v16
    %v124 = vpop.f32.mrf.mxu0
    %v125 = vadd.f32 %v105, %v124
    %126 = vdwg.mxu0
    %127 = vmatpush.msra.mxu0 %v66
    %128 = vmatpush.msra.mxu0 %v65
    %129 = vmatpush.msra.mxu0 %v64
    %130 = vmatpush.msra.mxu0 %v63
    %131 = vmatpush.msra.mxu0 %v62
    %132 = vmatpush.msra.mxu0 %v61
    %133 = vmatpush.msra.mxu0 %v60
    %134 = vmatpush.msra.mxu0 %v59
    %135 = vmatpush.msra.mxu0 %v58
    %136 = vmatpush.msra.mxu0 %v57
    %137 = vmatpush.msra.mxu0 %v56
    %138 = vmatpush.msra.mxu0 %v55
    %139 = vmatpush.msra.mxu0 %v54
    %140 = vmatpush.msra.mxu0 %v53
    %141 = vmatpush.msra.mxu0 %v52
    %142 = vmatpush.msra.mxu0 %v51
    %143 = vmatmul.f32.gmra.mxu0 %v17
    %v144 = vpop.f32.mrf.mxu0
    %v145 = vadd.f32 %v125, %v144
    %146 = vdwg.mxu0
    %147 = vmatpush.msra.mxu0 %v82
    %148 = vmatpush.msra.mxu0 %v81
    %149 = vmatpush.msra.mxu0 %v80
    %150 = vmatpush.msra.mxu0 %v79
    %151 = vmatpush.msra.mxu0 %v78
    %152 = vmatpush.msra.mxu0 %v77
    %153 = vmatpush.msra.mxu0 %v76
    %154 = vmatpush.msra.mxu0 %v75
    %155 = vmatpush.msra.mxu0 %v74
    %156 = vmatpush.msra.mxu0 %v73
    %157 = vmatpush.msra.mxu0 %v72
    %158 = vmatpush.msra.mxu0 %v71
    %159 = vmatpush.msra.mxu0 %v70
    %160 = vmatpush.msra.mxu0 %v69
    %161 = vmatpush.msra.mxu0 %v68
    %162 = vmatpush.msra.mxu0 %v67
    %163 = vmatmul.f32.gmra.mxu0 %v18
    %v164 = vpop.f32.mrf.mxu0
    %v165 = vadd.f32 %v145, %v164
    %166 = vdwg.mxu0
    %vm167 = vcmask 72704
    %168 = vst.msk [vmem:[#allocation2] sm:$0xff] %vm167, %v165
    // Predicated region
    $region14: #{classifier_forward.1} parent=1 // pred_check
      _
    $region15: #{classifier_forward.1} parent=1 // pred_check_branch
      %170 = sbr.rel (0) target = $region17
    $region16: #{classifier_forward.1} parent=1 // pred_region
      %172 = vsyncadd [#allocation3], 0
      %s174 = sshll.u32 [#allocation2], 4
      %s175 = int_to_ptr.vmem [resolvable:$true] %s174
      %s176 = sshll.u32 %s3, 4
      %s177 = int_to_ptr.hbm [resolvable:$true] %s176
      %179 = dma.vmem_to_hbm [thread:$0]  %s175, 128, %s177, [#allocation3]
    $region17: #{classifier_forward.1} parent=1 // pred_fallthru
      _
    // Predicated region
    $region18: #{classifier_forward.1} parent=1 // pred_check
      _
    $region19: #{classifier_forward.1} parent=1 // pred_check_branch
      %181 = sbr.rel (0) target = $region21
    $region20: #{classifier_forward.1} parent=1 // pred_region
      %183 = dma.done [#allocation3], 128
    $region21: #{classifier_forward.1} parent=1 // pred_fallthru
      _
    %184 = vsyncpa [#allocation3], 1

</llo_original>
